<compile_context>
chip_gen: v6e
topology: v6e:2x2x1
jax: 0.10.0
libtpu: 0.0.40
codegen_flags: <defaults>
</compile_context>

<pallas_src>
import functools

import jax
import jax.numpy as jnp
from jax import lax
from jax.experimental import pallas as pl
from jax.experimental.pallas import tpu as pltpu

_LANE = 128


def _round_up(x: int, m: int) -> int:
    return ((x + m - 1) // m) * m


def _cdiv(a: int, b: int) -> int:
    return -(-a // b)


def _sublane_pack(dtype) -> int:
    # 8 for 4-byte dtypes, 16 for bf16/f16, 32 for int8/fp8.
    return max(8, 32 // jnp.dtype(dtype).itemsize)


def _min_value(dtype):
    dtype = jnp.dtype(dtype)
    if jnp.issubdtype(dtype, jnp.floating):
        if dtype.itemsize == 1:
            # fp8 variants (e.g. float8_e4m3fn) have no -inf; the most negative
            # finite value keeps the masked max correct for finite inputs.
            return float(jnp.finfo(dtype).min)
        return float("-inf")
    if jnp.issubdtype(dtype, jnp.integer):
        return int(jnp.iinfo(dtype).min)
    raise NotImplementedError(f"unsupported dtype {dtype}")


def _default_budget_bytes() -> int:
    """Per-input-block VMEM byte budget (the pipeline double-buffers it)."""
    try:
        cap = pltpu.get_tpu_info().vmem_capacity_bytes
    except Exception:
        cap = 64 * 1024 * 1024          # conservative: assume v7x-sized VMEM
    if cap >= 100 * 1024 * 1024:        # v5e / v6e: 128 MiB physical VMEM
        return 16 * 1024 * 1024
    return 12 * 1024 * 1024             # v7x: 64 MiB physical VMEM


# ---------------------------------------------------------------------------
# Kernels
# ---------------------------------------------------------------------------

def _rowmax_kernel(x_ref, o_ref):
    """Single-pass path: whole reduction axis resident in this (tr, L) block."""
    o_ref[...] = jnp.max(x_ref[...], axis=-1, keepdims=True)


def _running_max_kernel(x_ref, o_ref, *, init_val, total_len, tl, ntl,
                        n_lane_blocks, needs_mask):
    """Tiled path. x_ref: (tr, tl) tile; o_ref: (1, tr, 1) resident partial max."""
    s = pl.program_id(0)          # reduction split ("parallel"; feeds 2nd TC on v7x)
    l = pl.program_id(2)          # reduction step ("arbitrary"; last grid axis)

    @pl.when(l == 0)
    def _():
        o_ref[...] = jnp.full(o_ref.shape, init_val, dtype=o_ref.dtype)

    x = x_ref[...]
    if needs_mask:
        # The last lane tile sticks out past L; neutralise the unspecified
        # partial-block padding before the max (few VPU ops, hidden under DMA).
        lane_block = jnp.minimum(s * ntl + l, n_lane_blocks - 1)
        pos = lane_block * tl + lax.broadcasted_iota(jnp.int32, x.shape, 1)
        x = jnp.where(pos < total_len, x, jnp.asarray(init_val, dtype=x.dtype))

    # Lane-axis reduce of the tile: VPU column folds + one XLU lane collapse.
    m = jnp.max(x, axis=-1, keepdims=True)          # (tr, 1)
    o_ref[...] = jnp.maximum(o_ref[...], m[None])   # (1, tr, 1)


# ---------------------------------------------------------------------------
# Wrapper
# ---------------------------------------------------------------------------

@functools.partial(jax.jit, static_argnames=("block_budget_bytes",))
def adaptive_max_pool3d(x, *, block_budget_bytes=None):
    """x: (N, C, D, H, W) -> (N, C, 1, 1, 1), global max over D, H, W."""
    N, C, D, H, W = x.shape
    rows = N * C
    L = D * H * W
    dtype = jnp.dtype(x.dtype)
    itemsize = dtype.itemsize
    pack = _sublane_pack(dtype)
    init_val = _min_value(dtype)
    budget = block_budget_bytes or _default_budget_bytes()
    vmem_limit = 2 * budget + 16 * 1024 * 1024   # double-buffer + headroom

    x2 = x.reshape(rows, L)   # contiguous collapse: metadata only, no HBM copy

    # Minimum legal row tile: the full row dim when rows <= packing (always a
    # legal block shape), otherwise the dtype's sublane packing.
    tr_min = rows if rows <= pack else pack

    if tr_min * L * itemsize <= budget:
        # ---- Path A: whole reduction axis fits in one block. 1-D parallel
        # grid over row tiles; each output written exactly once. ----
        if rows <= pack:
            tr = rows
        else:
            tr_budget = (budget // (L * itemsize)) // pack * pack
            tr_half = _round_up(_cdiv(rows, 2), pack)   # >= 2 row tiles (megacore)
            tr = max(pack, min(tr_budget, tr_half))
        grid = (_cdiv(rows, tr),)

        out2 = pl.pallas_call(
            _rowmax_kernel,
            out_shape=jax.ShapeDtypeStruct((rows, 1), dtype),
            grid=grid,
            in_specs=[pl.BlockSpec((tr, L), lambda i: (i, 0))],
            out_specs=pl.BlockSpec((tr, 1), lambda i: (i, 0)),
            compiler_params=pltpu.CompilerParams(
                dimension_semantics=("parallel",),
                vmem_limit_bytes=vmem_limit,
            ),
        )(x2)
        return out2.reshape(N, C, 1, 1, 1)

    # ---- Path B: reduction axis tiled; resident accumulator on last axis. ----
    tr = tr_min
    # Lane tile straight from the byte budget (multiple of 128, no divisor hunt).
    tl = max(_LANE, (budget // (tr * itemsize)) // _LANE * _LANE)
    n_lane_blocks = _cdiv(L, tl)
    n_row_blocks = _cdiv(rows, tr)

    # With a single row tile, split the reduction into 2 parallel partial
    # maxima so both v7x TensorCores stream HBM (harmless on v5e/v6e).  Allow
    # an uneven split only when the duplicated block is a small fraction.
    if n_row_blocks == 1 and (
            (n_lane_blocks >= 4 and n_lane_blocks % 2 == 0) or n_lane_blocks >= 9):
        nsplit = 2
    else:
        nsplit = 1
    ntl = _cdiv(n_lane_blocks, nsplit)

    if nsplit * ntl == n_lane_blocks:
        in_index = lambda s, i, l: (i, s * ntl + l)
    else:
        # Uneven split: clamp the overflow step to the last valid lane block;
        # re-reducing that block is idempotent for max.
        in_index = lambda s, i, l: (i, jnp.minimum(s * ntl + l, n_lane_blocks - 1))

    kernel = functools.partial(
        _running_max_kernel, init_val=init_val, total_len=L, tl=tl, ntl=ntl,
        n_lane_blocks=n_lane_blocks, needs_mask=(L % tl != 0))

    out3 = pl.pallas_call(
        kernel,
        out_shape=jax.ShapeDtypeStruct((nsplit, rows, 1), dtype),
        grid=(nsplit, n_row_blocks, ntl),           # reduction axis last
        in_specs=[pl.BlockSpec((tr, tl), in_index)],
        out_specs=pl.BlockSpec((1, tr, 1), lambda s, i, l: (s, i, 0)),
        compiler_params=pltpu.CompilerParams(
            dimension_semantics=("parallel", "parallel", "arbitrary"),
            vmem_limit_bytes=vmem_limit,
        ),
    )(x2)

    # Fold the per-split partial maxima (tiny: nsplit x rows elements).
    return jnp.max(out3, axis=0).reshape(N, C, 1, 1, 1)


if __name__ == "__main__":
    key = jax.random.PRNGKey(0)

    # 1) Aligned shape, f32 (single-pass path).
    N, C, D, H, W = 2, 4, 8, 8, 8
    x = jax.random.normal(key, (N, C, D, H, W), dtype=jnp.float32)
    out = adaptive_max_pool3d(x)
    jax.block_until_ready(out)
    ref = jnp.max(x, axis=(2, 3, 4), keepdims=True)
    assert out.shape == (N, C, 1, 1, 1), out.shape
    assert jnp.array_equal(out, ref), "mismatch vs reference (f32 aligned)"

    # 2) Odd extents: full-dim blocks, no padding, no masking needed.
    x_odd = jax.random.normal(jax.random.PRNGKey(1), (2, 3, 5, 6, 7),
                              dtype=jnp.float32)
    out_odd = adaptive_max_pool3d(x_odd)
    jax.block_until_ready(out_odd)
    ref_odd = jnp.max(x_odd, axis=(2, 3, 4), keepdims=True)
    assert out_odd.shape == (2, 3, 1, 1, 1), out_odd.shape
    assert jnp.array_equal(out_odd, ref_odd), "mismatch vs reference (f32 odd)"

    # 3) bf16: exercises the sublane-packing path (max is exact).
    x_bf = x.astype(jnp.bfloat16)
    out_bf = adaptive_max_pool3d(x_bf)
    jax.block_until_ready(out_bf)
    ref_bf = jnp.max(x_bf, axis=(2, 3, 4), keepdims=True)
    assert jnp.array_equal(out_bf, ref_bf), "mismatch vs reference (bf16)"

    # 4) Tiled-reduction path: tiny budget forces Path B with a 2-way parallel
    #    reduction split, an uneven (clamped) last step, and tail masking.
    x_big = jax.random.normal(jax.random.PRNGKey(2), (1, 4, 16, 24, 22),
                              dtype=jnp.float32)
    out_big = adaptive_max_pool3d(x_big, block_budget_bytes=16 * 1024)
    jax.block_until_ready(out_big)
    ref_big = jnp.max(x_big, axis=(2, 3, 4), keepdims=True)
    assert out_big.shape == (1, 4, 1, 1, 1), out_big.shape
    assert jnp.array_equal(out_big, ref_big), "mismatch vs reference (f32 tiled)"

    # 5) Integer dtype through the tiled path (iinfo.min init + tail mask).
    x_int = jax.random.randint(jax.random.PRNGKey(3), (2, 2, 8, 8, 9),
                               -1000, 1000, dtype=jnp.int32)
    out_int = adaptive_max_pool3d(x_int, block_budget_bytes=8 * 1024)
    jax.block_until_ready(out_int)
    ref_int = jnp.max(x_int, axis=(2, 3, 4), keepdims=True)
    assert jnp.array_equal(out_int, ref_int), "mismatch vs reference (int32 tiled)"

    print("KERNEL_OK")
</pallas_src>

<mosaic_0001>
module attributes {stable_mosaic.version = 11 : i64} {
  func.func @_rowmax_kernel(%arg0: i32, %arg1: memref<8x512xf32, #tpu.memory_space<vmem>>, %arg2: memref<8x1xf32, #tpu.memory_space<vmem>>) attributes {dimension_semantics = [#tpu.dimension_semantics<parallel>], iteration_bounds = array<i64: 1>, scalar_prefetch = 0 : i64, scratch_operands = 0 : i64, tpu.core_type = #tpu.core_type<tc>, window_params = [{transform_indices = @transform_0, window_bounds = array<i64: 8, 512>}, {transform_indices = @transform_1, window_bounds = array<i64: 8, 1>}]} {
    %c0 = arith.constant 0 : index
    %c0_0 = arith.constant 0 : index
    %0 = vector.load %arg1[%c0, %c0_0] : memref<8x512xf32, #tpu.memory_space<vmem>>, vector<8x512xf32>
    %cst = arith.constant dense<0xFF800000> : vector<8xf32>
    %1 = vector.multi_reduction <maximumf>, %0, %cst [1] : vector<8x512xf32> to vector<8xf32>
    %2 = vector.shape_cast %1 : vector<8xf32> to vector<8x1xf32>
    %c0_1 = arith.constant 0 : index
    %c0_2 = arith.constant 0 : index
    %3 = vector.load %arg2[%c0_1, %c0_2] : memref<8x1xf32, #tpu.memory_space<vmem>>, vector<8x1xf32>
    tpu.vector_store %arg2[%c0_1, %c0_2], %2 {strides = array<i32>} : memref<8x1xf32, #tpu.memory_space<vmem>>, vector<8x1xf32>,
    return
  }
  func.func @transform_0(%arg0: i32) -> (i32, i32) {
    %c0_i32 = arith.constant 0 : i32
    %c0_i32_0 = arith.constant 0 : i32
    return %arg0, %c0_i32 : i32, i32
  }
  func.func @transform_1(%arg0: i32) -> (i32, i32) {
    %c0_i32 = arith.constant 0 : i32
    %c0_i32_0 = arith.constant 0 : i32
    return %arg0, %c0_i32 : i32, i32
  }
}

</mosaic_0001>

<llo_original>
// kernel: adaptive_max_pool3d.1
$region0: #{adaptive_max_pool3d.1}
  #allocation0 [shape = 'u32[]', space=smem, size = 0x4, offset = 0x4, fixed_abs, tag = 'smem constant byte address 0x4 - core index']
  #allocation1 [shape = 'u32[144,128]{1,0:T(1,128)}', space=vmem, size = 0x12000, scoped, tag = 'internal scratch']
  %s0 = inlined_call_operand.vmem [shape: f32[8,512], index: 0, kind: input, shape index: {}]
  %s1 = inlined_call_operand.vmem [shape: f32[8,1], index: 1, kind: output, shape index: {}]
  %s2 = sld [smem:[#allocation0]]
  $region14: #{adaptive_max_pool3d.1} parent=0
    _
  %s4 = ssub.s32 1, %s2
  %s5 = scalar_select 0, %s4, %s2
  // Predicated region
  $region2: #{adaptive_max_pool3d.1} parent=0 // pred_check
    _
  $region3: #{adaptive_max_pool3d.1} parent=0 // pred_check_branch
    %7 = sbr.rel (0) target = $region5
  $region4: #{adaptive_max_pool3d.1} parent=0 // pred_region
    _
  $region5: #{adaptive_max_pool3d.1} parent=0 // pred_fallthru
    _
  %v8 = vld [vmem:[%s0] sm:$0xff]
  %v9 = vld [vmem:[%s0 + $0x8] sm:$0xff]
  %v10 = vld [vmem:[%s0 + $0x10] sm:$0xff]
  %v11 = vld [vmem:[%s0 + $0x18] sm:$0xff]
  %v12 = vmax.f32 %v8, %v9
  %v13 = vmax.f32 %v10, %v11
  %v14 = vmax.f32 %v12, %v13
  %15 = vmax.xlane.f32.xlu0 %v14
  %v16 = vpop.xlane.xlu0 %15
  %vm17 = vcmask 7168
  %18 = vst.msk [vmem:[%s1] sm:$0xff] %vm17, %v16
  // Predicated region
  $region6: #{adaptive_max_pool3d.1} parent=0 // pred_check
    _
  $region7: #{adaptive_max_pool3d.1} parent=0 // pred_check_branch
    %20 = sbr.rel (0) target = $region9
  $region8: #{adaptive_max_pool3d.1} parent=0 // pred_region
    _
  $region9: #{adaptive_max_pool3d.1} parent=0 // pred_fallthru
    _
  // Predicated region
  $region10: #{adaptive_max_pool3d.1} parent=0 // pred_check
    _
  $region11: #{adaptive_max_pool3d.1} parent=0 // pred_check_branch
    %22 = sbr.rel (0) target = $region13
  $region12: #{adaptive_max_pool3d.1} parent=0 // pred_region
    _
  $region13: #{adaptive_max_pool3d.1} parent=0 // pred_fallthru
    _

</llo_original>
